<compile_context>
chip_gen: v7x
topology: tpu7x:2x2x1
jax: 0.10.0
libtpu: 0.0.40
codegen_flags: <defaults>
</compile_context>

<pallas_src>
import functools

import jax
import jax.numpy as jnp
from jax.experimental import pallas as pl
from jax.experimental.pallas import tpu as pltpu

_EPS = 0.065
_LANES_WIDE = 1024            # lane-dense width for large inputs
_LANES_NARROW = 128
_TARGET_BLOCK_BYTES = 2 << 20  # ~2 MiB of native dtype per input block
_MAX_BLOCK_ELEMS = 1 << 20     # cap: keeps f32 intermediates <= ~4 MiB
_VMEM_LIMIT = 32 << 20         # safe on v5e/v6e (128 MiB) and v7x (64 MiB)


def _round_up(x, m):
    return -(-x // m) * m


def _sublane_multiple(dtype):
    # f32 packs (8,128) per vreg; sub-32-bit dtypes pack more rows per sublane.
    return max(8, 32 // jnp.dtype(dtype).itemsize)


def _pad_fill(dtype):
    dt = jnp.dtype(dtype)
    if jnp.issubdtype(dt, jnp.floating):
        return float("inf")          # never affects a running minimum
    return int(jnp.iinfo(dt).max)


def _plan_layout(n, dtype):
    """Pick (ncols, block_rows, padded_rows) for a flat length-n array.

    Blocks are sized by bytes (~2 MiB native per block) so every dtype/lane
    width lands on the HBM-bandwidth plateau.
    """
    dt = jnp.dtype(dtype)
    sub = _sublane_multiple(dt)
    # Prefer the widest lane-dense layout that needs no padding (zero-copy).
    if n % (_LANES_WIDE * sub) == 0 and n >= _LANES_WIDE * sub:
        ncols = _LANES_WIDE
    elif n % (_LANES_NARROW * sub) == 0:
        ncols = _LANES_NARROW
    else:
        ncols = _LANES_WIDE if n >= _LANES_WIDE * sub else _LANES_NARROW
    nrows = -(-n // ncols)
    nrows_al = _round_up(nrows, sub)
    block_elems = max(ncols * sub,
                      min(_TARGET_BLOCK_BYTES // dt.itemsize, _MAX_BLOCK_ELEMS))
    rows_target = max(sub, (block_elems // ncols) // sub * sub)
    block_rows = min(nrows_al, rows_target)
    return ncols, block_rows, nrows_al


def _to_2d(a, pad_value):
    """Flatten to (padded_rows, ncols).

    Zero-copy (pure reshape) for sizes that fit the tiling (all power-of-two
    NCHW shapes); ragged sizes pay a single jnp.pad pass that only pads up to
    a sublane-row multiple.
    """
    flat = a.reshape(-1)
    n = flat.shape[0]
    ncols, block_rows, rows = _plan_layout(n, a.dtype)
    total = rows * ncols
    if total != n:
        flat = jnp.pad(flat, (0, total - n), constant_values=pad_value)
    return flat.reshape(rows, ncols), n, ncols, block_rows


# ----------------------------------------------------------------------------
# Kernel 1: partial minima of target  ->  self.max = 1 / (min(target) + eps)
# ----------------------------------------------------------------------------
def _min_kernel(t_ref, m_ref, acc_ref, *, inner, nblocks, block_rows,
                total_rows, need_row_mask):
    p = pl.program_id(0)          # partial (parallel) axis
    i = pl.program_id(1)          # reduction (arbitrary) axis
    t = t_ref[...].astype(jnp.float32)

    if need_row_mask:
        # Last real block is partial: mask rows that fall past the array end
        # (the pad region inside the array is already +inf-filled).
        bid = jnp.minimum(p * inner + i, nblocks - 1)   # matches index_map clamp
        row0 = bid * block_rows
        rows_idx = jax.lax.broadcasted_iota(jnp.int32, t.shape, 0) + row0
        t = jnp.where(rows_idx < total_rows, t, jnp.inf)

    tile_min = jnp.min(t)         # VPU vreg-tree + one intra-vreg XLU reduce

    @pl.when(i == 0)
    def _():
        acc_ref[0] = tile_min

    @pl.when(i > 0)
    def _():
        acc_ref[0] = jnp.minimum(acc_ref[0], tile_min)

    @pl.when(i == inner - 1)
    def _():
        # Broadcast the partial min into this partial's (8,128) output block.
        m_ref[...] = jnp.full(m_ref.shape, acc_ref[0], jnp.float32)


def compute_max(target):
    # NOTE: assumes target + 0.065 > 0 (same positive-target assumption the
    # original module relies on), so max(1/(t+eps)) == 1/(min(t)+eps).
    target = jnp.asarray(target)
    n = int(target.size)
    if n == 0:
        raise ValueError("Transform requires a non-empty target array.")
    t2d, _, ncols, block_rows = _to_2d(target, _pad_fill(target.dtype))
    rows = t2d.shape[0]
    nblocks = pl.cdiv(rows, block_rows)
    num_partials = 2 if nblocks >= 2 else 1   # 2 disjoint halves for 2-TC chips
    inner = pl.cdiv(nblocks, num_partials)
    need_row_mask = (rows % block_rows) != 0

    def in_map(p, i):
        # Clamp out-of-range combos (when nblocks % num_partials != 0) onto the
        # last real block: harmless duplicate reads for a min-reduction.
        return (jnp.minimum(p * inner + i, nblocks - 1), 0)

    kernel = functools.partial(
        _min_kernel, inner=inner, nblocks=nblocks, block_rows=block_rows,
        total_rows=rows, need_row_mask=need_row_mask)

    partials = pl.pallas_call(
        kernel,
        out_shape=jax.ShapeDtypeStruct((num_partials * 8, 128), jnp.float32),
        grid_spec=pltpu.PrefetchScalarGridSpec(
            num_scalar_prefetch=0,
            grid=(num_partials, inner),
            in_specs=[pl.BlockSpec((block_rows, ncols), in_map)],
            out_specs=pl.BlockSpec((8, 128), lambda p, i: (p, 0)),
            scratch_shapes=[pltpu.SMEM((1,), jnp.float32)],
        ),
        compiler_params=pltpu.CompilerParams(
            dimension_semantics=("parallel", "arbitrary"),
            vmem_limit_bytes=_VMEM_LIMIT),
    )(t2d)
    min_t = jnp.min(partials)     # tiny (16,128) combine in XLA
    return 1.0 / (min_t + _EPS)   # f32 scalar


# ----------------------------------------------------------------------------
# Kernel 2: forward  y = 1/(x+eps)/max  ==  reciprocal((x+eps) * max)
# ----------------------------------------------------------------------------
def _fwd_kernel(max_ref, x_ref, o_ref):
    x = x_ref[...].astype(jnp.float32)
    # One VPU mul + one EUP reciprocal per element (divide would burn VALU).
    y = pl.reciprocal((x + _EPS) * max_ref[0], approx=False)
    o_ref[...] = y.astype(o_ref.dtype)


def transform_forward(x, max_val):
    x = jnp.asarray(x)
    orig_shape = x.shape
    orig_dtype = x.dtype
    out_dtype = (orig_dtype if jnp.issubdtype(orig_dtype, jnp.floating)
                 else jnp.float32)
    n = int(x.size)
    if n == 0:
        return jnp.zeros(orig_shape, out_dtype)

    x2d, _, ncols, block_rows = _to_2d(x, 1)
    rows = x2d.shape[0]
    grid = (pl.cdiv(rows, block_rows),)
    max_arr = jnp.asarray(max_val, jnp.float32).reshape((1,))

    y2d = pl.pallas_call(
        _fwd_kernel,
        out_shape=jax.ShapeDtypeStruct((rows, ncols), out_dtype),
        grid_spec=pltpu.PrefetchScalarGridSpec(
            num_scalar_prefetch=1,
            grid=grid,
            in_specs=[pl.BlockSpec((block_rows, ncols), lambda i, m: (i, 0))],
            out_specs=pl.BlockSpec((block_rows, ncols), lambda i, m: (i, 0)),
        ),
        compiler_params=pltpu.CompilerParams(
            dimension_semantics=("parallel",),
            vmem_limit_bytes=_VMEM_LIMIT),
    )(max_arr, x2d)

    if rows * ncols == n:
        return y2d.reshape(orig_shape)          # zero-copy path
    return y2d.reshape(-1)[:n].reshape(orig_shape)


class TransformPallas:
    """Mirror of the PyTorch module; `self.max` is computed from `target`
    with a Pallas min-reduction kernel at construction time."""

    def __init__(self, target):
        self.max = compute_max(target)

    def forward(self, x):
        return transform_forward(x, self.max)

    # TODO(synk): `inverse` is not part of the requested forward-pass port; it
    # is a straightforward elementwise kernel analogous to `forward`.


if __name__ == "__main__":
    key = jax.random.PRNGKey(0)
    k_t, k_x, k_t2, k_x2 = jax.random.split(key, 4)

    # "target" used to fit the transform (strictly positive, like the original)
    target = jax.random.uniform(k_t, (2, 4, 16, 16), jnp.float32,
                                minval=0.1, maxval=2.0)
    x = jax.random.uniform(k_x, (2, 4, 16, 16), jnp.float32,
                           minval=0.1, maxval=2.0)

    mod = TransformPallas(target)
    y = jax.block_until_ready(mod.forward(x))

    ref_max = (1.0 / (target + _EPS)).max()
    ref_y = 1.0 / (x + _EPS) / ref_max
    assert y.shape == x.shape and y.dtype == x.dtype
    assert jnp.allclose(mod.max, ref_max, rtol=1e-6, atol=0.0), "max mismatch"
    assert jnp.allclose(y, ref_y, rtol=1e-5, atol=1e-6), "mismatch vs reference"

    # Ragged (non-power-of-two) shape: exercises pad / +inf fill / tail slice.
    target2 = jax.random.uniform(k_t2, (3, 5, 7, 11), jnp.float32,
                                 minval=0.1, maxval=2.0)
    x2 = jax.random.uniform(k_x2, (3, 5, 7, 11), jnp.float32,
                            minval=0.1, maxval=2.0)
    mod2 = TransformPallas(target2)
    y2 = jax.block_until_ready(mod2.forward(x2))
    ref_max2 = (1.0 / (target2 + _EPS)).max()
    ref_y2 = 1.0 / (x2 + _EPS) / ref_max2
    assert y2.shape == x2.shape and y2.dtype == x2.dtype
    assert jnp.allclose(mod2.max, ref_max2, rtol=1e-6, atol=0.0), "max mismatch (ragged)"
    assert jnp.allclose(y2, ref_y2, rtol=1e-5, atol=1e-6), "mismatch vs reference (ragged)"

    print("KERNEL_OK")
</pallas_src>

<mosaic_0001>
module attributes {stable_mosaic.version = 11 : i64} {
  func.func @_min_kernel(%arg0: i32, %arg1: i32, %arg2: memref<16x128xf32, #tpu.memory_space<vmem>>, %arg3: memref<8x128xf32, #tpu.memory_space<vmem>>, %arg4: memref<1xf32, #tpu.memory_space<smem>>) attributes {dimension_semantics = [#tpu.dimension_semantics<parallel>, #tpu.dimension_semantics<arbitrary>], iteration_bounds = array<i64: 1, 1>, scalar_prefetch = 0 : i64, scratch_operands = 1 : i64, tpu.core_type = #tpu.core_type<tc>, window_params = [{transform_indices = @transform_0, window_bounds = array<i64: 16, 128>}, {transform_indices = @transform_1, window_bounds = array<i64: 8, 128>}]} {
    %c0 = arith.constant 0 : index
    %c0_0 = arith.constant 0 : index
    %0 = vector.load %arg2[%c0, %c0_0] : memref<16x128xf32, #tpu.memory_space<vmem>>, vector<16x128xf32>
    %1 = vector.shape_cast %0 : vector<16x128xf32> to vector<1x16x128xf32>
    %cst = arith.constant dense<0x7F800000> : vector<1xf32>
    %2 = vector.multi_reduction <minimumf>, %1, %cst [1, 2] : vector<1x16x128xf32> to vector<1xf32>
    %3 = vector.shape_cast %2 : vector<1xf32> to vector<1x1x1xf32>
    %4 = vector.extract %3[0, 0, 0] : f32 from vector<1x1x1xf32>
    %c0_i32 = arith.constant 0 : i32
    %5 = arith.cmpi eq, %arg1, %c0_i32 : i32
    %6 = arith.extui %5 : i1 to i32
    %c0_i32_1 = arith.constant 0 : i32
    %7 = arith.cmpi ne, %6, %c0_i32_1 : i32
    scf.if %7 {
      %c0_6 = arith.constant 0 : index
      %14 = memref.load %arg4[%c0_6] : memref<1xf32, #tpu.memory_space<smem>>
      memref.store %4, %arg4[%c0_6] : memref<1xf32, #tpu.memory_space<smem>>
    } else {
    }
    %c0_i32_2 = arith.constant 0 : i32
    %8 = arith.cmpi sgt, %arg1, %c0_i32_2 : i32
    %9 = arith.extui %8 : i1 to i32
    %c0_i32_3 = arith.constant 0 : i32
    %10 = arith.cmpi ne, %9, %c0_i32_3 : i32
    scf.if %10 {
      %c0_6 = arith.constant 0 : index
      %14 = memref.load %arg4[%c0_6] : memref<1xf32, #tpu.memory_space<smem>>
      %15 = arith.minimumf %14, %4 : f32
      %c0_7 = arith.constant 0 : index
      %16 = memref.load %arg4[%c0_7] : memref<1xf32, #tpu.memory_space<smem>>
      memref.store %15, %arg4[%c0_7] : memref<1xf32, #tpu.memory_space<smem>>
    } else {
    }
    %c0_i32_4 = arith.constant 0 : i32
    %11 = arith.cmpi eq, %arg1, %c0_i32_4 : i32
    %12 = arith.extui %11 : i1 to i32
    %c0_i32_5 = arith.constant 0 : i32
    %13 = arith.cmpi ne, %12, %c0_i32_5 : i32
    scf.if %13 {
      %c0_6 = arith.constant 0 : index
      %14 = memref.load %arg4[%c0_6] : memref<1xf32, #tpu.memory_space<smem>>
      %15 = vector.broadcast %14 : f32 to vector<8x128xf32>
      %c0_7 = arith.constant 0 : index
      %c0_8 = arith.constant 0 : index
      %16 = vector.load %arg3[%c0_7, %c0_8] : memref<8x128xf32, #tpu.memory_space<vmem>>, vector<8x128xf32>
      tpu.vector_store %arg3[%c0_7, %c0_8], %15 {strides = array<i32>} : memref<8x128xf32, #tpu.memory_space<vmem>>, vector<8x128xf32>,
    } else {
    }
    return
  }
  func.func @transform_0(%arg0: i32, %arg1: i32) -> (i32, i32) {
    %c1_i32 = arith.constant 1 : i32
    %0 = arith.muli %arg0, %c1_i32 : i32
    %1 = arith.addi %0, %arg1 : i32
    %c0_i32 = arith.constant 0 : i32
    %2 = arith.minsi %1, %c0_i32 : i32
    %c0_i32_0 = arith.constant 0 : i32
    %c0_i32_1 = arith.constant 0 : i32
    return %2, %c0_i32_0 : i32, i32
  }
  func.func @transform_1(%arg0: i32, %arg1: i32) -> (i32, i32) {
    %c0_i32 = arith.constant 0 : i32
    %c0_i32_0 = arith.constant 0 : i32
    return %arg0, %c0_i32 : i32, i32
  }
}

</mosaic_0001>

<llo_original>
// kernel: tpu_custom_call.1
$region0: #{tpu_custom_call.1}
  #allocation0 [shape = 'u32[]', space=smem, size = 0x4, offset = 0x4, fixed_abs, tag = 'smem constant byte address 0x4 - core index']
  #allocation1 [shape = 'u32[144,128]{1,0:T(1,128)}', space=vmem, size = 0x12000, scoped, tag = 'internal scratch']
  #allocation2 [shape = 'f32[1]{0:T(128)}', space=smem, size = 0x200, scoped, tag = 'scratch operand']
  %s0 = inlined_call_operand.hbm [shape: f32[16,128], index: 0, kind: input, shape index: {}]
  %s1 = inlined_call_operand.hbm [shape: f32[8,128], index: 1, kind: output, shape index: {}]
  %s2 = sld [smem:[#allocation0]]
  $region30: #{tpu_custom_call.1} parent=0
    _
  %s4 = ssub.s32 1, %s2
  %s5 = scalar_select 0, %s4, %s2
  $region1: #{tpu_custom_call.1} parent=0
    #allocation3 [shape = 'u8[8192]{0}', space=vmem, size = 0x2000, scoped, tag = 'input window, operand 0, single buffered']
    #allocation4 [shape = 's32[1]{0}', space=sflag, size = 0x4, scoped, tag = 'scoped memory for tpu_custom_call.1']
    #allocation5 [shape = 's32[1]{0}', space=sflag, size = 0x4, scoped, tag = 'scoped memory for tpu_custom_call.1']
    #allocation6 [shape = 'u8[4096]{0}', space=vmem, size = 0x1000, scoped, tag = 'output window, operand 0, single buffered']
    %6 = vsyncpa [#allocation4], 0
    %7 = vsyncpa [#allocation5], 0
    // Predicated region
    $region2: #{tpu_custom_call.1} parent=1 // pred_check
      _
    $region3: #{tpu_custom_call.1} parent=1 // pred_check_branch
      %9 = sbr.rel (0) target = $region5
    $region4: #{tpu_custom_call.1} parent=1 // pred_region
      %s10 = sadd.s32 0, 0
      %p11 = scmp.lt.s32.totalorder %s10, 0
      %s12 = scalar_select %p11, %s10, 0
      %s13 = smul.u32 2, %s12
      %s15 = ssub.s32 256, 256
      %16 = vsyncadd [#allocation4], %s15
      %s17 = smul.addr %s13, 128
      %s18 = scalar_lea.hbm %s0, %s17
      %s19 = sshll.u32 [#allocation3], 4
      %s20 = int_to_ptr.vmem [resolvable:$true] %s19
      %25 = dma.hbm_to_vmem [thread:$0]  %s18, 256, %s20, [#allocation4], 128, 128, 8
    $region5: #{tpu_custom_call.1} parent=1 // pred_fallthru
      _
    // Predicated region
    $region6: #{tpu_custom_call.1} parent=1 // pred_check
      _
    $region7: #{tpu_custom_call.1} parent=1 // pred_check_branch
      %27 = sbr.rel (0) target = $region9
    $region8: #{tpu_custom_call.1} parent=1 // pred_region
      %28 = dma.done [#allocation4], 256
    $region9: #{tpu_custom_call.1} parent=1 // pred_fallthru
      _
    %s29 = sadd.s32 0, 0
    %p30 = scmp.lt.s32.totalorder %s29, 0
    %s31 = scalar_select %p30, %s29, 0
    %s32 = smul.u32 2, %s31
    %v33 = vld [vmem:[#allocation3] sm:$0xff]
    %v34 = vld [vmem:[#allocation3 + $0x8] sm:$0xff]
    %v35 = vmin.f32 %v33, %v34
    %36 = vmin.xlane.f32.xlu0 %v35
    %v37 = vpop.xlane.xlu0 %36
    %v38 = vrot.slane %v37, 4
    %v39 = vmin.f32 %v37, %v38
    %v40 = vrot.slane %v39, 2
    %v41 = vmin.f32 %v39, %v40
    %v42 = vrot.slane %v41, 1
    %v43 = vmin.f32 %v41, %v42
    %s44 = vtos %v43
    %p45 = scmp.eq.s32.totalorder 0, 0
    // Predicated region
    $region10: #{tpu_custom_call.1} parent=1 // pred_check
      %p46 = pneg %p45
    $region11: #{tpu_custom_call.1} parent=1 // pred_check_branch
      %48 = sbr.rel (%p46) target = $region13
    $region12: #{tpu_custom_call.1} parent=1 // pred_region
      %s49 = scalar_lea.smem [#allocation2], 0
      %50 = sst [smem:[%s49]] %s44
    $region13: #{tpu_custom_call.1} parent=1 // pred_fallthru
      _
    %p51 = scmp.gt.s32.totalorder 0, 0
    // Predicated region
    $region14: #{tpu_custom_call.1} parent=1 // pred_check
      %p52 = pneg %p51
    $region15: #{tpu_custom_call.1} parent=1 // pred_check_branch
      %54 = sbr.rel (%p52) target = $region17
    $region16: #{tpu_custom_call.1} parent=1 // pred_region
      %s55 = sld [smem:[#allocation2]]
      %s56 = smin.f32 %s55, %s44
      %s57 = scalar_lea.smem [#allocation2], 0
      %58 = sst [smem:[%s57]] %s56
    $region17: #{tpu_custom_call.1} parent=1 // pred_fallthru
      _
    // Predicated region
    $region18: #{tpu_custom_call.1} parent=1 // pred_check
      %p59 = pneg %p45
    $region19: #{tpu_custom_call.1} parent=1 // pred_check_branch
      %61 = sbr.rel (%p59) target = $region21
    $region20: #{tpu_custom_call.1} parent=1 // pred_region
      %s62 = sld [smem:[#allocation2]]
      %v63 = vstv %s62
      %64 = vst [vmem:[#allocation6] sm:$0xff] %v63
    $region21: #{tpu_custom_call.1} parent=1 // pred_fallthru
      _
    // Predicated region
    $region22: #{tpu_custom_call.1} parent=1 // pred_check
      _
    $region23: #{tpu_custom_call.1} parent=1 // pred_check_branch
      %66 = sbr.rel (0) target = $region25
    $region24: #{tpu_custom_call.1} parent=1 // pred_region
      %s68 = ssub.s32 128, 128
      %69 = vsyncadd [#allocation5], %s68
      %s71 = sshll.u32 [#allocation6], 4
      %s72 = int_to_ptr.vmem [resolvable:$true] %s71
      %74 = dma.vmem_to_hbm [thread:$0]  %s72, 128, %s1, [#allocation5]
    $region25: #{tpu_custom_call.1} parent=1 // pred_fallthru
      _
    // Predicated region
    $region26: #{tpu_custom_call.1} parent=1 // pred_check
      _
    $region27: #{tpu_custom_call.1} parent=1 // pred_check_branch
      %76 = sbr.rel (0) target = $region29
    $region28: #{tpu_custom_call.1} parent=1 // pred_region
      %77 = dma.done [#allocation5], 128
    $region29: #{tpu_custom_call.1} parent=1 // pred_fallthru
      _
    %78 = vsyncpa [#allocation4], 1
    %79 = vsyncpa [#allocation5], 1

</llo_original>
